<compile_context>
chip_gen: v5e
topology: v5e:2x2
jax: 0.10.0
libtpu: 0.0.40
codegen_flags: <defaults>
</compile_context>

<pallas_src>
import functools

import jax
import jax.numpy as jnp
from jax.experimental import pallas as pl
from jax.experimental.pallas import tpu as pltpu


def _round_up(x, m):
    return ((x + m - 1) // m) * m


def _cdiv(a, b):
    return (a + b - 1) // b


def _vmem_budget_bytes():
    """Generation-aware scoped-VMEM cap (v7x: 64 MiB physical per TensorCore)."""
    cap = 64 << 20  # conservative default = smallest generation (v7x)
    try:
        info = pltpu.get_tpu_info()
        cap = int(getattr(info, "vmem_capacity_bytes", cap))
    except Exception:
        pass
    return int(min((cap * 3) // 4, 96 << 20))


# -----------------------------------------------------------------------------
# Kernels
# -----------------------------------------------------------------------------
def _resident_w_kernel(x_ref, w_ref, b_ref, o_ref):
    """out_tile = x_tile @ W + b with a fully VMEM-resident weight.

    x_ref: (tm, K)   input rows in their original dtype; cast to the MXU
                     compute dtype here (VPU work hidden under the matmul).
    w_ref: (K, Np)   W.T in compute dtype, constant index_map -> DMA'd once.
    b_ref: (1, Np)   bias, float32.
    o_ref: (tm, Np)  output tile, original input dtype.
    """
    x = x_ref[...].astype(w_ref.dtype)
    acc = jnp.dot(x, w_ref[...], preferred_element_type=jnp.float32)
    acc = acc + b_ref[...]                       # f32 bias, f32 accumulate
    o_ref[...] = acc.astype(o_ref.dtype)


def _tiled_kernel(x_ref, w_ref, b_ref, o_ref, acc_ref, *, k_rem, tk):
    """K-tiled matmul with a resident f32 accumulator (large-weight path)."""
    k = pl.program_id(2)
    nk = pl.num_programs(2)

    @pl.when(k == 0)
    def _init():
        # Fold the float32 bias into the accumulator once.
        acc_ref[...] = jnp.broadcast_to(b_ref[...], acc_ref.shape)

    x = x_ref[...].astype(w_ref.dtype)
    if k_rem:  # static: K is ragged w.r.t. tk -> zero the OOB columns of x.
        limit = jnp.where(k == nk - 1, k_rem, tk)
        col = jax.lax.broadcasted_iota(jnp.int32, x.shape, 1)
        x = jnp.where(col < limit, x, jnp.zeros_like(x))

    acc_ref[...] += jnp.dot(x, w_ref[...], preferred_element_type=jnp.float32)

    @pl.when(k == nk - 1)
    def _finalize():
        o_ref[...] = acc_ref[...].astype(o_ref.dtype)


# -----------------------------------------------------------------------------
# Setup-time wrapper (parameter prep happens once, not per forward call)
# -----------------------------------------------------------------------------
def make_linear_conv2d(weight, bias=None, *, compute_dtype=jnp.bfloat16,
                       tm=512, tn=512, tk=1024,
                       max_resident_weight_bytes=8 << 20):
    """Build the forward fn for Linear_Conv2d.

    weight: (out_features, in_features) -- nn.Linear / 1x1-conv weight
    bias:   (out_features,) or None
    """
    weight = jnp.asarray(weight)
    out_features, in_features = weight.shape
    w_item = jnp.dtype(compute_dtype).itemsize

    # Lane-dense N: pad to a 128-multiple. No-op (and therefore no output
    # column slice later) when out_features is already aligned.
    n_pad = _round_up(out_features, 128)

    vmem_budget = _vmem_budget_bytes()

    # Bias stays float32 -> no bf16 rounding relative to the PyTorch reference.
    b2 = jnp.zeros((1, n_pad), jnp.float32)
    if bias is not None:
        b2 = b2.at[:, :out_features].set(jnp.asarray(bias).astype(jnp.float32))

    resident = (in_features * n_pad * w_item) <= max_resident_weight_bytes

    if resident:
        # ------------------- resident-weight path ---------------------------
        # W.T is NOT padded along K (so x needs no K padding / masking).
        wt = jnp.zeros((in_features, n_pad), compute_dtype)
        wt = wt.at[:, :out_features].set(weight.T.astype(compute_dtype))
        w_bytes = in_features * n_pad * w_item + n_pad * 4  # + f32 bias

        def forward(x):
            assert x.shape[-1] == in_features
            lead = x.shape[:-1]
            m = 1
            for d in lead:
                m *= d
            x_flat = x.reshape(m, in_features)            # metadata-only
            x_item = jnp.dtype(x.dtype).itemsize

            # Row tile: largest that fits the VMEM budget (double-buffered x
            # and out blocks + resident W), then split so that >=2 row blocks
            # exist and both v7x TensorCores get work.
            per_row = 2 * (in_features * x_item + n_pad * x_item)
            tm_eff = min(tm, _round_up(m, 8))
            while tm_eff > 64 and w_bytes + per_row * tm_eff > (vmem_budget * 3) // 4:
                tm_eff //= 2
            tm_eff = max(8, _round_up(tm_eff, 8))
            if m > 8 and _cdiv(m, tm_eff) < 2:
                tm_eff = max(8, _round_up(_cdiv(m, 2), 8))
            gm = _cdiv(m, tm_eff)

            vmem_est = w_bytes + per_row * tm_eff
            vmem_limit = int(min(max(2 * vmem_est, 16 << 20), vmem_budget))

            out_flat = pl.pallas_call(
                _resident_w_kernel,
                out_shape=jax.ShapeDtypeStruct((m, n_pad), x.dtype),
                grid_spec=pltpu.PrefetchScalarGridSpec(
                    num_scalar_prefetch=0,
                    grid=(gm,),
                    in_specs=[
                        pl.BlockSpec((tm_eff, in_features), lambda i: (i, 0)),
                        pl.BlockSpec((in_features, n_pad), lambda i: (0, 0)),
                        pl.BlockSpec((1, n_pad), lambda i: (0, 0)),
                    ],
                    out_specs=pl.BlockSpec((tm_eff, n_pad), lambda i: (i, 0)),
                ),
                compiler_params=pltpu.CompilerParams(
                    dimension_semantics=("parallel",),
                    vmem_limit_bytes=vmem_limit,
                ),
            )(x_flat, wt, b2)

            out = out_flat if n_pad == out_features else out_flat[:, :out_features]
            return out.reshape(lead + (out_features,))

        return forward

    # ---------------------- tiled (large-weight) path ------------------------
    tk_eff = min(tk, _round_up(in_features, 128))
    k_pad = _round_up(in_features, tk_eff)
    k_rem = in_features % tk_eff
    tn_eff = min(tn, n_pad)

    # One-time weight prep: transpose, zero-pad K/N, cast to compute dtype.
    wt = jnp.zeros((k_pad, n_pad), compute_dtype)
    wt = wt.at[:in_features, :out_features].set(weight.T.astype(compute_dtype))

    kernel = functools.partial(_tiled_kernel, k_rem=k_rem, tk=tk_eff)

    def forward(x):
        assert x.shape[-1] == in_features
        lead = x.shape[:-1]
        m = 1
        for d in lead:
            m *= d
        x_flat = x.reshape(m, in_features)                # metadata-only
        x_item = jnp.dtype(x.dtype).itemsize

        tm_eff = min(tm, _round_up(m, 8))
        grid = (_cdiv(m, tm_eff), _cdiv(n_pad, tn_eff), k_pad // tk_eff)

        vmem_est = (2 * (tm_eff * tk_eff * x_item          # x blocks (2-buf)
                         + tk_eff * tn_eff * w_item        # W blocks
                         + tn_eff * 4                      # bias blocks
                         + tm_eff * tn_eff * x_item)       # out blocks
                    + tm_eff * tn_eff * 4)                 # f32 accumulator
        vmem_limit = int(min(max(2 * vmem_est, 16 << 20), vmem_budget))

        out_flat = pl.pallas_call(
            kernel,
            out_shape=jax.ShapeDtypeStruct((m, n_pad), x.dtype),
            grid_spec=pltpu.PrefetchScalarGridSpec(
                num_scalar_prefetch=0,
                grid=grid,
                in_specs=[
                    pl.BlockSpec((tm_eff, tk_eff), lambda i, j, k: (i, k)),
                    pl.BlockSpec((tk_eff, tn_eff), lambda i, j, k: (k, j)),
                    pl.BlockSpec((1, tn_eff), lambda i, j, k: (0, j)),
                ],
                out_specs=pl.BlockSpec((tm_eff, tn_eff), lambda i, j, k: (i, j)),
                scratch_shapes=[pltpu.VMEM((tm_eff, tn_eff), jnp.float32)],
            ),
            compiler_params=pltpu.CompilerParams(
                dimension_semantics=("parallel", "parallel", "arbitrary"),
                vmem_limit_bytes=vmem_limit,
            ),
        )(x_flat, wt, b2)

        out = out_flat if n_pad == out_features else out_flat[:, :out_features]
        return out.reshape(lead + (out_features,))

    return forward


def linear_conv2d(x, weight, bias=None, **kwargs):
    """Convenience one-shot wrapper (prep + forward)."""
    return make_linear_conv2d(weight, bias, **kwargs)(x)


if __name__ == "__main__":
    # Shapes implied by the forward: any leading dims, last dim = in_features.
    batch, seq = 2, 8
    in_features, out_features = 32, 64

    key = jax.random.PRNGKey(0)
    kx, kw, kb = jax.random.split(key, 3)

    x = jax.random.normal(kx, (batch, seq, in_features), dtype=jnp.float32)
    weight = jax.random.normal(kw, (out_features, in_features),
                               dtype=jnp.float32) * 0.05
    bias = jax.random.normal(kb, (out_features,), dtype=jnp.float32) * 0.05

    ref = x @ weight.T + bias

    # Default fast path: resident bf16 weight, f32 accumulation, f32 bias.
    out_bf16 = jax.block_until_ready(make_linear_conv2d(weight, bias)(x))

    # f32 resident path for a tight numerical check.
    out_f32 = jax.block_until_ready(
        make_linear_conv2d(weight, bias, compute_dtype=jnp.float32)(x))

    # Force the tiled (large-weight) kernel to exercise the 3-D grid,
    # accumulator init/finalize, and the ragged-K in-kernel mask.
    out_tiled = jax.block_until_ready(
        make_linear_conv2d(weight, bias, compute_dtype=jnp.float32,
                           max_resident_weight_bytes=0)(x))

    # bias=None path (the original module supports Linear layers without bias).
    out_nobias = jax.block_until_ready(
        make_linear_conv2d(weight, None, compute_dtype=jnp.float32)(x))

    assert out_bf16.shape == (batch, seq, out_features)
    assert out_f32.shape == (batch, seq, out_features)
    assert jnp.allclose(out_f32, ref, atol=1e-5, rtol=1e-5)
    assert jnp.allclose(out_tiled, ref, atol=1e-5, rtol=1e-5)
    assert jnp.allclose(out_nobias, x @ weight.T, atol=1e-5, rtol=1e-5)
    assert jnp.allclose(out_bf16, ref, atol=5e-2, rtol=5e-2)

    print("KERNEL_OK")
</pallas_src>

<mosaic_0001>
module attributes {stable_mosaic.version = 11 : i64} {
  func.func @_resident_w_kernel(%arg0: i32, %arg1: memref<8x32xf32, #tpu.memory_space<vmem>>, %arg2: memref<32x128xbf16, #tpu.memory_space<vmem>>, %arg3: memref<1x128xf32, #tpu.memory_space<vmem>>, %arg4: memref<8x128xf32, #tpu.memory_space<vmem>>) attributes {dimension_semantics = [#tpu.dimension_semantics<parallel>], iteration_bounds = array<i64: 2>, scalar_prefetch = 0 : i64, scratch_operands = 0 : i64, tpu.core_type = #tpu.core_type<tc>, window_params = [{transform_indices = @transform_0, window_bounds = array<i64: 8, 32>}, {pipeline_mode = #tpu.pipeline_mode<synchronous>, transform_indices = @transform_1, window_bounds = array<i64: 32, 128>}, {pipeline_mode = #tpu.pipeline_mode<synchronous>, transform_indices = @transform_2, window_bounds = array<i64: 1, 128>}, {transform_indices = @transform_3, window_bounds = array<i64: 8, 128>}]} {
    %c0 = arith.constant 0 : index
    %c0_0 = arith.constant 0 : index
    %0 = vector.load %arg1[%c0, %c0_0] : memref<8x32xf32, #tpu.memory_space<vmem>>, vector<8x32xf32>
    %1 = arith.truncf %0 : vector<8x32xf32> to vector<8x32xbf16>
    %c0_1 = arith.constant 0 : index
    %c0_2 = arith.constant 0 : index
    %2 = vector.load %arg2[%c0_1, %c0_2] : memref<32x128xbf16, #tpu.memory_space<vmem>>, vector<32x128xbf16>
    %cst = arith.constant dense<0.000000e+00> : vector<8x128xf32>
    %3 = tpu.matmul %1, %2, %cst {dimension_numbers = #tpu.dot_dimension_numbers<[1], [0], [0], [1], [0, 0, 1, 1], [], []>} : vector<8x32xbf16>, vector<32x128xbf16>, vector<8x128xf32> -> vector<8x128xf32>
    %c0_3 = arith.constant 0 : index
    %c0_4 = arith.constant 0 : index
    %4 = vector.load %arg3[%c0_3, %c0_4] : memref<1x128xf32, #tpu.memory_space<vmem>>, vector<1x128xf32>
    %5 = vector.broadcast %4 : vector<1x128xf32> to vector<8x128xf32>
    %6 = arith.addf %3, %5 : vector<8x128xf32>
    %c0_5 = arith.constant 0 : index
    %c0_6 = arith.constant 0 : index
    %7 = vector.load %arg4[%c0_5, %c0_6] : memref<8x128xf32, #tpu.memory_space<vmem>>, vector<8x128xf32>
    tpu.vector_store %arg4[%c0_5, %c0_6], %6 {strides = array<i32>} : memref<8x128xf32, #tpu.memory_space<vmem>>, vector<8x128xf32>,
    return
  }
  func.func @transform_0(%arg0: i32) -> (i32, i32) {
    %c0_i32 = arith.constant 0 : i32
    %c0_i32_0 = arith.constant 0 : i32
    return %arg0, %c0_i32 : i32, i32
  }
  func.func @transform_1(%arg0: i32) -> (i32, i32) {
    %c0_i32 = arith.constant 0 : i32
    %c0_i32_0 = arith.constant 0 : i32
    %c0_i32_1 = arith.constant 0 : i32
    return %c0_i32, %c0_i32_0 : i32, i32
  }
  func.func @transform_2(%arg0: i32) -> (i32, i32) {
    %c0_i32 = arith.constant 0 : i32
    %c0_i32_0 = arith.constant 0 : i32
    %c0_i32_1 = arith.constant 0 : i32
    return %c0_i32, %c0_i32_0 : i32, i32
  }
  func.func @transform_3(%arg0: i32) -> (i32, i32) {
    %c0_i32 = arith.constant 0 : i32
    %c0_i32_0 = arith.constant 0 : i32
    return %arg0, %c0_i32 : i32, i32
  }
}

</mosaic_0001>

<llo_original>
// kernel: tpu_custom_call.1
$region0: #{tpu_custom_call.1}
  #allocation0 [shape = 'u32[]', space=smem, size = 0x4, offset = 0x4, fixed_abs, tag = 'smem constant byte address 0x4 - core index']
  #allocation1 [shape = 'u32[72,128]{1,0:T(1,128)}', space=vmem, size = 0x9000, scoped, tag = 'internal scratch']
  %s0 = inlined_call_operand.hbm [shape: f32[16,32], index: 0, kind: input, shape index: {}]
  %s1 = inlined_call_operand.hbm [shape: bf16[32,128], index: 1, kind: input, shape index: {}]
  %s2 = inlined_call_operand.vmem [shape: f32[1,128], index: 2, kind: input, shape index: {}]
  %s3 = inlined_call_operand.hbm [shape: f32[16,128], index: 3, kind: output, shape index: {}]
  %s4 = sld [smem:[#allocation0]]
  $region53: #{tpu_custom_call.1} parent=0
    _
  %s6 = ssub.s32 1, %s4
  %s7 = scalar_select 0, %s6, %s4
  $region1: #{tpu_custom_call.1} parent=0
    #allocation2 [shape = 'u8[8192]{0}', space=vmem, size = 0x2000, scoped, tag = 'input window, operand 0']
    #allocation3 [shape = 's32[2]{0}', space=sflag, size = 0x8, scoped, tag = 'scoped memory for tpu_custom_call.1']
    #allocation4 [shape = 's32[2]{0}', space=sflag, size = 0x8, scoped, tag = 'scoped memory for tpu_custom_call.1']
    #allocation5 [shape = 'u8[8192]{0}', space=vmem, size = 0x2000, scoped, tag = 'input window, operand 1, single buffered']
    #allocation6 [shape = 's32[1]{0}', space=sflag, size = 0x4, scoped, tag = 'scoped memory for tpu_custom_call.1']
    #allocation7 [shape = 'u8[8192]{0}', space=vmem, size = 0x2000, scoped, tag = 'output window, operand 0']
    %8 = vsyncpa [#allocation3], 0
    %s9 = scalar_lea.sflag [#allocation3], 1
    %10 = vsyncpa %s9, 0
    %11 = vsyncpa [#allocation6], 0
    %12 = vsyncpa [#allocation4], 0
    %s13 = scalar_lea.sflag [#allocation4], 1
    %14 = vsyncpa %s13, 0
    loop: start=0, step=1, limit=4
    $region2: #{tpu_custom_call.1} parent=1 // loop_pre_header
      _
    $region3: #{tpu_custom_call.1} parent=1 // loop_header
      %s16 = sphi 0, %s20
      %p17 = scmp.ge.s32.totalorder %s16, 4
      %s26 = sphi 0, %s28
      %s29 = sphi 0, %s26
      %s30 = sphi 0, %s29
      %s46 = sphi 0, %s30
      %s50 = sphi 0, %s50
      %s52 = sphi 0, %s50
      %s53 = sphi 0, %s52
      %s67 = sphi 0, %s53
      %s71 = sphi 0, %s71
      %s73 = sphi 0, %s71
      %s74 = sphi 0, %s73
      %s88 = sphi 0, %s74
      %s94 = sphi 0, %s96
      %s97 = sphi 0, %s94
      %s98 = sphi 0, %s97
      %s114 = sphi 0, %s98
    $region4: #{tpu_custom_call.1} parent=1 // loop_header_branch
      %19 = sbr.rel (%p17) target = $region8
    $region5: #{tpu_custom_call.1} parent=1 // loop_body
      %s21 = ssub.s32 %s16, 1
      %s22 = ssub.s32 %s16, 2
      %s23 = sadd.s32 %s16, 1
      %s24 = ssub.s32 %s16, %s23
      %p25 = scmp.eq.s32.totalorder %s24, 0
      %s27 = sadd.s32 %s26, 1
      %s28 = scalar_select %p25, %s26, %s27
      %p31 = pneg %p25
      %p32 = scmp.eq.s32.totalorder %s16, 1
      %p33 = por %p31, %p32
      %p34 = scmp.ne.s32.totalorder %s26, %s29
      %p35 = scmp.eq.s32.totalorder %s16, 0
      %p36 = por %p34, %p35
      %p37 = scmp.ne.s32.totalorder %s26, %s29
      %p38 = scmp.eq.s32.totalorder %s21, 1
      %p39 = por %p37, %p38
      %p40 = scmp.ne.s32.totalorder %s29, %s30
      %p41 = scmp.eq.s32.totalorder %s21, 0
      %p42 = por %p40, %p41
      %p43 = scmp.ne.s32.totalorder %s29, %s30
      %p44 = scmp.eq.s32.totalorder %s22, 1
      %p45 = por %p43, %p44
      %p47 = scmp.ne.s32.totalorder %s30, %s46
      %p48 = scmp.eq.s32.totalorder %s22, 0
      %p49 = por %p47, %p48
      %s51 = sadd.s32 %s50, 1
      %p54 = scmp.eq.s32.totalorder %s16, 1
      %p55 = scmp.ne.s32.totalorder %s50, %s52
      %p56 = scmp.eq.s32.totalorder %s16, 0
      %p57 = por %p55, %p56
      %p58 = scmp.ne.s32.totalorder %s50, %s52
      %p59 = scmp.eq.s32.totalorder %s21, 1
      %p60 = por %p58, %p59
      %p61 = scmp.ne.s32.totalorder %s52, %s53
      %p62 = scmp.eq.s32.totalorder %s21, 0
      %p63 = por %p61, %p62
      %p64 = scmp.ne.s32.totalorder %s52, %s53
      %p65 = scmp.eq.s32.totalorder %s22, 1
      %p66 = por %p64, %p65
      %p68 = scmp.ne.s32.totalorder %s53, %s67
      %p69 = scmp.eq.s32.totalorder %s22, 0
      %p70 = por %p68, %p69
      %s72 = sadd.s32 %s71, 1
      %p75 = scmp.eq.s32.totalorder %s16, 1
      %p76 = scmp.ne.s32.totalorder %s71, %s73
      %p77 = scmp.eq.s32.totalorder %s16, 0
      %p78 = por %p76, %p77
      %p79 = scmp.ne.s32.totalorder %s71, %s73
      %p80 = scmp.eq.s32.totalorder %s21, 1
      %p81 = por %p79, %p80
      %p82 = scmp.ne.s32.totalorder %s73, %s74
      %p83 = scmp.eq.s32.totalorder %s21, 0
      %p84 = por %p82, %p83
      %p85 = scmp.ne.s32.totalorder %s73, %s74
      %p86 = scmp.eq.s32.totalorder %s22, 1
      %p87 = por %p85, %p86
      %p89 = scmp.ne.s32.totalorder %s74, %s88
      %p90 = scmp.eq.s32.totalorder %s22, 0
      %p91 = por %p89, %p90
      %s92 = ssub.s32 %s16, %s23
      %p93 = scmp.eq.s32.totalorder %s92, 0
      %s95 = sadd.s32 %s94, 1
      %s96 = scalar_select %p93, %s94, %s95
      %p99 = pneg %p93
      %p100 = scmp.eq.s32.totalorder %s16, 1
      %p101 = por %p99, %p100
      %p102 = scmp.ne.s32.totalorder %s94, %s97
      %p103 = scmp.eq.s32.totalorder %s16, 0
      %p104 = por %p102, %p103
      %p105 = scmp.ne.s32.totalorder %s94, %s97
      %p106 = scmp.eq.s32.totalorder %s21, 1
      %p107 = por %p105, %p106
      %p108 = scmp.ne.s32.totalorder %s97, %s98
      %p109 = scmp.eq.s32.totalorder %s21, 0
      %p110 = por %p108, %p109
      %p111 = scmp.ne.s32.totalorder %s97, %s98
      %p112 = scmp.eq.s32.totalorder %s22, 1
      %p113 = por %p111, %p112
      %p115 = scmp.ne.s32.totalorder %s98, %s114
      %p116 = scmp.eq.s32.totalorder %s22, 0
      %p117 = por %p115, %p116
      %p118 = scmp.le.s32.totalorder 1, %s16
      %p119 = scmp.lt.s32.totalorder %s16, 3
      %p120 = pnand %p118, %p119
      %p121 = pneg %p120
      // Predicated region
      $region9: #{tpu_custom_call.1} parent=5 // pred_check
        _
      $region10: #{tpu_custom_call.1} parent=5 // pred_check_branch
        %123 = sbr.rel (%p120) target = $region12
      $region11: #{tpu_custom_call.1} parent=5 // pred_region
        %s124 = ssub.s32 %s16, 1
        // Predicated region
        $region13: #{tpu_custom_call.1} parent=11 // pred_check
          %p125 = pneg %p63
        $region14: #{tpu_custom_call.1} parent=11 // pred_check_branch
          %127 = sbr.rel (%p125) target = $region16
        $region15: #{tpu_custom_call.1} parent=11 // pred_region
          %129 = vsyncadd [#allocation6], 0
          %s130 = sshll.u32 %s1, 4
          %s131 = int_to_ptr.hbm [resolvable:$true] %s130
          %s132 = sshll.u32 [#allocation5], 4
          %s133 = int_to_ptr.vmem [resolvable:$true] %s132
          %138 = dma.hbm_to_vmem [thread:$0]  %s131, 256, %s133, [#allocation6], 64, 64, 4
        $region16: #{tpu_custom_call.1} parent=11 // pred_fallthru
          _
        // Predicated region
        $region17: #{tpu_custom_call.1} parent=11 // pred_check
          %p139 = pneg %p84
        $region18: #{tpu_custom_call.1} parent=11 // pred_check_branch
          %141 = sbr.rel (%p139) target = $region20
        $region19: #{tpu_custom_call.1} parent=11 // pred_region
          _
        $region20: #{tpu_custom_call.1} parent=11 // pred_fallthru
          _
      $region12: #{tpu_custom_call.1} parent=5 // pred_fallthru
        _
      %p142 = scmp.lt.s32.totalorder %s16, 2
      // Predicated region
      $region21: #{tpu_custom_call.1} parent=5 // pred_check
        %p143 = pneg %p142
      $region22: #{tpu_custom_call.1} parent=5 // pred_check_branch
        %145 = sbr.rel (%p143) target = $region24
      $region23: #{tpu_custom_call.1} parent=5 // pred_region
        // Predicated region
        $region25: #{tpu_custom_call.1} parent=23 // pred_check
          %p146 = pneg %p36
        $region26: #{tpu_custom_call.1} parent=23 // pred_check_branch
          %148 = sbr.rel (%p146) target = $region28
        $region27: #{tpu_custom_call.1} parent=23 // pred_region
          %s149 = sand.u32 %s26, 1
          %s150 = scalar_lea.sflag [#allocation3], %s149
          %s151 = sand.u32 %s26, 1
          %s152 = smul.addr %s151, 8
          %s153 = scalar_lea.vmem [#allocation2], %s152
          %155 = vsyncadd %s150, 0
          %s156 = smul.addr %s16, 8
          %s157 = scalar_lea.hbm %s0, %s156
          %s159 = sshll.u32 %s157, 4
          %s160 = int_to_ptr.hbm [resolvable:$true] %s159
          %s161 = sshll.u32 %s153, 4
          %s162 = int_to_ptr.vmem [resolvable:$true] %s161
          %164 = dma.hbm_to_vmem [thread:$0]  %s160, 128, %s162, %s150
        $region28: #{tpu_custom_call.1} parent=23 // pred_fallthru
          _
      $region24: #{tpu_custom_call.1} parent=5 // pred_fallthru
        _
      %p165 = scmp.le.s32.totalorder 1, %s16
      %p166 = scmp.lt.s32.totalorder %s16, 3
      %p167 = pnand %p165, %p166
      %p168 = pneg %p167
      // Predicated region
      $region29: #{tpu_custom_call.1} parent=5 // pred_check
        _
      $region30: #{tpu_custom_call.1} parent=5 // pred_check_branch
        %170 = sbr.rel (%p167) target = $region32
      $region31: #{tpu_custom_call.1} parent=5 // pred_region
        %s171 = ssub.s32 %s16, 1
        %s172 = sand.u32 %s29, 1
        %s173 = scalar_lea.sflag [#allocation3], %s172
        %s174 = sand.u32 %s29, 1
        %s175 = smul.addr %s174, 8
        %s176 = scalar_lea.vmem [#allocation2], %s175
        // Predicated region
        $region33: #{tpu_custom_call.1} parent=31 // pred_check
          %p177 = pneg %p42
        $region34: #{tpu_custom_call.1} parent=31 // pred_check_branch
          %179 = sbr.rel (%p177) target = $region36
        $region35: #{tpu_custom_call.1} parent=31 // pred_region
          %181 = dma.done %s173, 128
        $region36: #{tpu_custom_call.1} parent=31 // pred_fallthru
          _
        // Predicated region
        $region37: #{tpu_custom_call.1} parent=31 // pred_check
          %p182 = pneg %p63
        $region38: #{tpu_custom_call.1} parent=31 // pred_check_branch
          %184 = sbr.rel (%p182) target = $region40
        $region39: #{tpu_custom_call.1} parent=31 // pred_region
          %186 = dma.done [#allocation6], 256
        $region40: #{tpu_custom_call.1} parent=31 // pred_fallthru
          _
        %s187 = sand.u32 %s29, 1
        %s188 = scalar_lea.sflag [#allocation3], %s187
        %s189 = sand.u32 %s29, 1
        %s190 = smul.addr %s189, 8
        %s191 = scalar_lea.vmem [#allocation2], %s190
        %p192 = pneg %p42
        %p193 = pneg %p39
        %p194 = pneg %p63
        %p195 = pneg %p60
        %p196 = pneg %p84
        %p197 = pneg %p81
        %p198 = pneg %p110
        %p199 = pneg %p107
        %s200 = sand.u32 %s97, 1
        %s201 = scalar_lea.sflag [#allocation4], %s200
        %s202 = sand.u32 %s97, 1
        %s203 = smul.addr %s202, 8
        %s204 = scalar_lea.vmem [#allocation7], %s203
        %v206 = vld [vmem:[%s176] sm:$0xff]
        %v207 = vpack.c.bf16 %v206, %v206
        %v208 = vld [vmem:[#allocation5] sm:$0xf]
        %v209 = vld [vmem:[#allocation5 + $0x4] sm:$0xf]
        %v210 = vld [vmem:[#allocation5 + $0x8] sm:$0xf]
        %v211 = vld [vmem:[#allocation5 + $0xc] sm:$0xf]
        %v212 = vld [vmem:[%s2] sm:$0x1]
        %v214 = vperm.slane %v212, 0
        %v220 = vunpack.c.l.b16 %v208
        %v221 = vunpack.c.l.b16 %v209
        %v222 = vunpack.c.l.b16 %v210
        %v223 = vunpack.c.l.b16 %v211
        %v224 = vpack.c.b16 %v221, %v220
        %v225 = vpack.c.b16 %v223, %v222
        %vm228 = vcmask 261120
        %v230 = vsel %vm228, %v207, 0
        %232 = vmatpush.bf16.msra.mxu0 0
        %233 = vmatpush.bf16.msra.mxu0 0
        %234 = vmatpush.bf16.msra.mxu0 0
        %235 = vmatpush.bf16.msra.mxu0 0
        %236 = vmatpush.bf16.msra.mxu0 0
        %237 = vmatpush.bf16.msra.mxu0 0
        %238 = vmatpush.bf16.msra.mxu0 %v225
        %239 = vmatpush.bf16.msra.mxu0 %v224
        %240 = vmatmul.bf16.gmra.mxu0 %v230
        %v241 = vpop.f32.mrf.mxu0
        %v242 = vadd.f32 %v214, %v241
        %v243 = vpop.f32.mrf.mxu0
        %244 = vdwg.mxu0
        %245 = vst [vmem:[%s204] sm:$0xff] %v242
        %s246 = sand.u32 %s97, 1
        %s247 = scalar_lea.sflag [#allocation4], %s246
        %s248 = sand.u32 %s97, 1
        %s249 = smul.addr %s248, 8
        %s250 = scalar_lea.vmem [#allocation7], %s249
        // Predicated region
        $region41: #{tpu_custom_call.1} parent=31 // pred_check
          %p251 = pneg %p107
        $region42: #{tpu_custom_call.1} parent=31 // pred_check_branch
          %253 = sbr.rel (%p251) target = $region44
        $region43: #{tpu_custom_call.1} parent=31 // pred_region
          %255 = vsyncadd %s247, 0
          %s256 = smul.addr %s21, 8
          %s257 = scalar_lea.hbm %s3, %s256
          %s259 = sshll.u32 %s250, 4
          %s260 = int_to_ptr.vmem [resolvable:$true] %s259
          %s261 = sshll.u32 %s257, 4
          %s262 = int_to_ptr.hbm [resolvable:$true] %s261
          %264 = dma.vmem_to_hbm [thread:$0]  %s260, 128, %s262, %s247
        $region44: #{tpu_custom_call.1} parent=31 // pred_fallthru
          _
      $region32: #{tpu_custom_call.1} parent=5 // pred_fallthru
        _
      %p265 = scmp.le.s32.totalorder 2, %s16
      // Predicated region
      $region45: #{tpu_custom_call.1} parent=5 // pred_check
        %p266 = pneg %p265
      $region46: #{tpu_custom_call.1} parent=5 // pred_check_branch
        %268 = sbr.rel (%p266) target = $region48
      $region47: #{tpu_custom_call.1} parent=5 // pred_region
        %s269 = ssub.s32 %s16, 2
        // Predicated region
        $region49: #{tpu_custom_call.1} parent=47 // pred_check
          %p270 = pneg %p113
        $region50: #{tpu_custom_call.1} parent=47 // pred_check_branch
          %272 = sbr.rel (%p270) target = $region52
        $region51: #{tpu_custom_call.1} parent=47 // pred_region
          %s273 = sand.u32 %s98, 1
          %s274 = scalar_lea.sflag [#allocation4], %s273
          %s275 = sand.u32 %s98, 1
          %s276 = smul.addr %s275, 8
          %s277 = scalar_lea.vmem [#allocation7], %s276
          %279 = dma.done %s274, 128
        $region52: #{tpu_custom_call.1} parent=47 // pred_fallthru
          _
      $region48: #{tpu_custom_call.1} parent=5 // pred_fallthru
        _
    $region6: #{tpu_custom_call.1} parent=1 // loop_footer
      %s20 = sadd.s32 1, %s16
    $region7: #{tpu_custom_call.1} parent=1 // loop_footer_branch
      %15 = sbr.rel target = $region3
    $region8: #{tpu_custom_call.1} parent=1 // loop_exit
      _
    %280 = vsyncpa [#allocation3], 1
    %s281 = scalar_lea.sflag [#allocation3], 1
    %282 = vsyncpa %s281, 1
    %283 = vsyncpa [#allocation6], 1
    %284 = vsyncpa [#allocation4], 1
    %s285 = scalar_lea.sflag [#allocation4], 1
    %286 = vsyncpa %s285, 1

</llo_original>
